<compile_context>
chip_gen: v6e
topology: v6e:2x2x1
jax: 0.10.0
libtpu: 0.0.40
codegen_flags: <defaults>
</compile_context>

<pallas_src>
import numpy as np
import jax
import jax.numpy as jnp
from jax.experimental import pallas as pl
from jax.experimental.pallas import tpu as pltpu

HIDDEN = 64


# ----------------------------------------------------------------------------
# Pallas kernel: fused 3-layer MLP on one batch tile, batch along the lane axis.
# ----------------------------------------------------------------------------
def _value_mlp_kernel(x_ref, w_ref, b_ref, o_ref):
    # x_ref: (S, TB)       batch along lanes (lane-dense everywhere)
    # w_ref: (2H+1, SP)    rows 0:H = W1 (cols 0:S), rows H:2H = W2, row 2H = W3
    # b_ref: (H, 3)        col 0 = b1, col 1 = b2, [0, 2] = b3
    # o_ref: (1, TB)       lane-dense value row
    s = x_ref.shape[0]
    x = x_ref[...]                                              # (S, TB)

    w1 = w_ref[0:HIDDEN, 0:s]                                   # (64, S)
    w2 = w_ref[HIDDEN:2 * HIDDEN, 0:HIDDEN]                     # (64, 64)
    w3 = w_ref[2 * HIDDEN:2 * HIDDEN + 1, 0:HIDDEN]             # (1, 64)
    b1 = b_ref[:, 0:1]                                          # (64, 1)
    b2 = b_ref[:, 1:2]                                          # (64, 1)
    b3 = b_ref[0:1, 2:3]                                        # (1, 1)

    h1 = jnp.tanh(jnp.dot(w1, x, preferred_element_type=jnp.float32) + b1)    # (64, TB)
    h2 = jnp.tanh(jnp.dot(w2, h1, preferred_element_type=jnp.float32) + b2)   # (64, TB)
    o_ref[...] = jnp.dot(w3, h2, preferred_element_type=jnp.float32) + b3     # (1, TB)


# ----------------------------------------------------------------------------
# Tile-size selection (trace-time static): amortize the ~0.35us/step overhead,
# but keep >= 2 tiles for B > 128 so v7x megacore gets both TensorCores.
# ----------------------------------------------------------------------------
def _cdiv(a, b):
    return -(-a // b)


def _round_up(a, b):
    return _cdiv(a, b) * b


def _pick_tile(batch, state_dim):
    # ~4 MiB cap on the x tile keeps us far under the scoped-VMEM default even
    # double-buffered and even for large state dims.
    vmem_cap = max(128, ((4 << 20) // (4 * max(state_dim, 1))) // 128 * 128)
    max_tb = min(2048, vmem_cap)
    if batch <= 128:
        return 128
    tb = _round_up(_cdiv(batch, 2), 128)
    return max(128, min(max_tb, tb))


# ----------------------------------------------------------------------------
# Wrapper: batch tiled along lanes, packed params resident in VMEM,
# single lane-dense (1, B_pad) output row.
# ----------------------------------------------------------------------------
def _value_forward_impl(x, params):
    wcat, bcat = params
    batch, state_dim = x.shape

    tb = _pick_tile(batch, state_dim)
    num_tiles = _cdiv(batch, tb)
    b_pad = num_tiles * tb

    # Batch along the lane axis. (Ideally produced transposed upstream; zero-pad
    # extra batch columns so no garbage flows through tanh for discarded rows.)
    x_t = x.T                                                    # (S, B)
    if b_pad != batch:
        x_t = jnp.pad(x_t, ((0, 0), (0, b_pad - batch)))

    out = pl.pallas_call(
        _value_mlp_kernel,
        out_shape=jax.ShapeDtypeStruct((1, b_pad), jnp.float32),
        grid=(num_tiles,),
        in_specs=[
            pl.BlockSpec((state_dim, tb), lambda i: (0, i)),     # x: tiled over batch (lanes)
            pl.BlockSpec(wcat.shape, lambda i: (0, 0)),          # packed weights: VMEM-resident
            pl.BlockSpec(bcat.shape, lambda i: (0, 0)),          # packed biases:  VMEM-resident
        ],
        out_specs=pl.BlockSpec((1, tb), lambda i: (0, i)),       # lane-dense output row
        compiler_params=pltpu.CompilerParams(
            dimension_semantics=("parallel",),                   # megacore on v7x
        ),
    )(x_t, wcat, bcat)

    # (1, B_pad) -> (B,): drop padded columns; this is the torch .squeeze(1).
    return out[0, :batch]


value_forward = jax.jit(_value_forward_impl)


# ----------------------------------------------------------------------------
# Deterministic parameter init reproducing layer_init semantics:
#   orthogonal_(weight, gain=sqrt(2)), constant_(bias, 0.0)
# Parameters are packed ONCE in kernel-ready layout (torch (out, in) weights):
#   wcat (2H+1, max(S, H)): rows 0:64 = W1, rows 64:128 = W2, row 128 = W3
#   bcat (H, 3):            col 0 = b1, col 1 = b2, [0, 2] = b3
# ----------------------------------------------------------------------------
def _orthogonal(key, out_features, in_features, gain):
    rows, cols = out_features, in_features
    flat = jax.random.normal(key, (max(rows, cols), min(rows, cols)), dtype=jnp.float32)
    q, r = jnp.linalg.qr(flat)
    d = jnp.sign(jnp.diagonal(r))      # sign correction -> uniform over orthogonal matrices
    q = q * d[None, :]
    if rows < cols:
        q = q.T
    return (gain * q[:rows, :cols]).astype(jnp.float32)


def init_value_params(key, state_dim):
    gain = float(np.sqrt(2.0))
    k1, k2, k3 = jax.random.split(key, 3)
    w1 = _orthogonal(k1, HIDDEN, state_dim, gain)        # (64, S)   torch layout
    w2 = _orthogonal(k2, HIDDEN, HIDDEN, gain)           # (64, 64)
    w3 = _orthogonal(k3, 1, HIDDEN, gain)                # (1, 64)

    sp = max(state_dim, HIDDEN)
    wcat = jnp.zeros((2 * HIDDEN + 1, sp), jnp.float32)
    wcat = wcat.at[0:HIDDEN, 0:state_dim].set(w1)
    wcat = wcat.at[HIDDEN:2 * HIDDEN, 0:HIDDEN].set(w2)
    wcat = wcat.at[2 * HIDDEN:2 * HIDDEN + 1, 0:HIDDEN].set(w3)

    bcat = jnp.zeros((HIDDEN, 3), jnp.float32)           # torch init: all biases 0
    return (wcat, bcat)


# ----------------------------------------------------------------------------
# Pure-JAX reference for correctness checks (unpacks the same packed params).
# ----------------------------------------------------------------------------
def value_forward_ref(x, params):
    wcat, bcat = params
    s = x.shape[1]
    w1 = wcat[0:HIDDEN, 0:s]
    w2 = wcat[HIDDEN:2 * HIDDEN, 0:HIDDEN]
    w3 = wcat[2 * HIDDEN, 0:HIDDEN]
    b1 = bcat[:, 0]
    b2 = bcat[:, 1]
    b3 = bcat[0, 2]
    h1 = jnp.tanh(x @ w1.T + b1)
    h2 = jnp.tanh(h1 @ w2.T + b2)
    return h2 @ w3 + b3


if __name__ == "__main__":
    key = jax.random.PRNGKey(0)
    k_params, k_x_small, k_x_big, k_bias = jax.random.split(key, 4)

    state_dim = 16
    params = init_value_params(k_params, state_dim)

    # Small shape consistent with the module: batch=4 states of dim 16 (single tile).
    x_small = jax.random.normal(k_x_small, (4, state_dim), dtype=jnp.float32)
    out_small = jax.block_until_ready(value_forward(x_small, params))
    ref_small = value_forward_ref(x_small, params)
    assert out_small.shape == (4,), out_small.shape
    np.testing.assert_allclose(np.asarray(out_small), np.asarray(ref_small),
                               rtol=1e-5, atol=1e-5)

    # Ragged, multi-tile batch: exercises the grid (2 x 512 tiles), zero-padding path
    # and the lane-dense (1, B_pad) output row.
    x_big = jax.random.normal(k_x_big, (1000, state_dim), dtype=jnp.float32)
    out_big = jax.block_until_ready(value_forward(x_big, params))
    ref_big = value_forward_ref(x_big, params)
    assert out_big.shape == (1000,), out_big.shape
    np.testing.assert_allclose(np.asarray(out_big), np.asarray(ref_big),
                               rtol=1e-5, atol=1e-5)

    # Non-zero biases (torch init is zero) to exercise the packed-bias slices.
    wcat, _ = params
    bcat_rand = jax.random.normal(k_bias, (HIDDEN, 3), dtype=jnp.float32) * 0.1
    params_rand = (wcat, bcat_rand)
    out_b = jax.block_until_ready(value_forward(x_big, params_rand))
    ref_b = value_forward_ref(x_big, params_rand)
    np.testing.assert_allclose(np.asarray(out_b), np.asarray(ref_b),
                               rtol=1e-5, atol=1e-5)

    print("KERNEL_OK")
</pallas_src>

<mosaic_0001>
module attributes {stable_mosaic.version = 11 : i64} {
  func.func @_value_mlp_kernel(%arg0: i32, %arg1: memref<16x128xf32, #tpu.memory_space<vmem>>, %arg2: memref<129x64xf32, #tpu.memory_space<vmem>>, %arg3: memref<64x3xf32, #tpu.memory_space<vmem>>, %arg4: memref<1x128xf32, #tpu.memory_space<vmem>>) attributes {dimension_semantics = [#tpu.dimension_semantics<parallel>], iteration_bounds = array<i64: 1>, scalar_prefetch = 0 : i64, scratch_operands = 0 : i64, tpu.core_type = #tpu.core_type<tc>, window_params = [{transform_indices = @transform_0, window_bounds = array<i64: 16, 128>}, {pipeline_mode = #tpu.pipeline_mode<synchronous>, transform_indices = @transform_1, window_bounds = array<i64: 129, 64>}, {pipeline_mode = #tpu.pipeline_mode<synchronous>, transform_indices = @transform_2, window_bounds = array<i64: 64, 3>}, {transform_indices = @transform_3, window_bounds = array<i64: 1, 128>}]} {
    %c0 = arith.constant 0 : index
    %c0_0 = arith.constant 0 : index
    %0 = vector.load %arg1[%c0, %c0_0] : memref<16x128xf32, #tpu.memory_space<vmem>>, vector<16x128xf32>
    %c0_1 = arith.constant 0 : index
    %c0_2 = arith.constant 0 : index
    %1 = vector.load %arg2[%c0_1, %c0_2] : memref<129x64xf32, #tpu.memory_space<vmem>>, vector<64x16xf32>
    %c64 = arith.constant 64 : index
    %c0_3 = arith.constant 0 : index
    %2 = vector.load %arg2[%c64, %c0_3] : memref<129x64xf32, #tpu.memory_space<vmem>>, vector<64x64xf32>
    %c128 = arith.constant 128 : index
    %c0_4 = arith.constant 0 : index
    %3 = vector.load %arg2[%c128, %c0_4] : memref<129x64xf32, #tpu.memory_space<vmem>>, vector<1x64xf32>
    %c0_5 = arith.constant 0 : index
    %c0_6 = arith.constant 0 : index
    %4 = vector.load %arg3[%c0_5, %c0_6] : memref<64x3xf32, #tpu.memory_space<vmem>>, vector<64x1xf32>
    %c0_7 = arith.constant 0 : index
    %c1 = arith.constant 1 : index
    %5 = vector.load %arg3[%c0_7, %c1] : memref<64x3xf32, #tpu.memory_space<vmem>>, vector<64x1xf32>
    %c0_8 = arith.constant 0 : index
    %c2 = arith.constant 2 : index
    %6 = vector.load %arg3[%c0_8, %c2] : memref<64x3xf32, #tpu.memory_space<vmem>>, vector<1x1xf32>
    %cst = arith.constant dense<0.000000e+00> : vector<64x128xf32>
    %7 = tpu.matmul %1, %0, %cst {dimension_numbers = #tpu.dot_dimension_numbers<[1], [0], [0], [1], [0, 0, 1, 1], [], []>} : vector<64x16xf32>, vector<16x128xf32>, vector<64x128xf32> -> vector<64x128xf32>
    %8 = vector.broadcast %4 : vector<64x1xf32> to vector<64x128xf32>
    %9 = arith.addf %7, %8 : vector<64x128xf32>
    %10 = math.tanh %9 : vector<64x128xf32>
    %cst_9 = arith.constant dense<0.000000e+00> : vector<64x128xf32>
    %11 = tpu.matmul %2, %10, %cst_9 {dimension_numbers = #tpu.dot_dimension_numbers<[1], [0], [0], [1], [0, 0, 1, 1], [], []>} : vector<64x64xf32>, vector<64x128xf32>, vector<64x128xf32> -> vector<64x128xf32>
    %12 = vector.broadcast %5 : vector<64x1xf32> to vector<64x128xf32>
    %13 = arith.addf %11, %12 : vector<64x128xf32>
    %14 = math.tanh %13 : vector<64x128xf32>
    %cst_10 = arith.constant dense<0.000000e+00> : vector<1x128xf32>
    %15 = tpu.matmul %3, %14, %cst_10 {dimension_numbers = #tpu.dot_dimension_numbers<[1], [0], [0], [1], [0, 0, 1, 1], [], []>} : vector<1x64xf32>, vector<64x128xf32>, vector<1x128xf32> -> vector<1x128xf32>
    %16 = vector.broadcast %6 : vector<1x1xf32> to vector<1x128xf32>
    %17 = arith.addf %15, %16 : vector<1x128xf32>
    %c0_11 = arith.constant 0 : index
    %c0_12 = arith.constant 0 : index
    %18 = vector.load %arg4[%c0_11, %c0_12] : memref<1x128xf32, #tpu.memory_space<vmem>>, vector<1x128xf32>
    tpu.vector_store %arg4[%c0_11, %c0_12], %17 {strides = array<i32>} : memref<1x128xf32, #tpu.memory_space<vmem>>, vector<1x128xf32>,
    return
  }
  func.func @transform_0(%arg0: i32) -> (i32, i32) {
    %c0_i32 = arith.constant 0 : i32
    %c0_i32_0 = arith.constant 0 : i32
    return %c0_i32, %arg0 : i32, i32
  }
  func.func @transform_1(%arg0: i32) -> (i32, i32) {
    %c0_i32 = arith.constant 0 : i32
    %c0_i32_0 = arith.constant 0 : i32
    %c0_i32_1 = arith.constant 0 : i32
    return %c0_i32, %c0_i32_0 : i32, i32
  }
  func.func @transform_2(%arg0: i32) -> (i32, i32) {
    %c0_i32 = arith.constant 0 : i32
    %c0_i32_0 = arith.constant 0 : i32
    %c0_i32_1 = arith.constant 0 : i32
    return %c0_i32, %c0_i32_0 : i32, i32
  }
  func.func @transform_3(%arg0: i32) -> (i32, i32) {
    %c0_i32 = arith.constant 0 : i32
    %c0_i32_0 = arith.constant 0 : i32
    return %c0_i32, %arg0 : i32, i32
  }
}

</mosaic_0001>

<llo_original>
// kernel: _value_forward_impl.1
$region0: #{_value_forward_impl.1}
  #allocation0 [shape = 'u32[]', space=smem, size = 0x4, offset = 0x4, fixed_abs, tag = 'smem constant byte address 0x4 - core index']
  #allocation1 [shape = 'u32[144,128]{1,0:T(1,128)}', space=vmem, size = 0x12000, scoped, tag = 'internal scratch']
  %s0 = inlined_call_operand.vmem [shape: f32[16,128], index: 0, kind: input, shape index: {}]
  %s1 = inlined_call_operand.vmem [shape: f32[129,64], index: 1, kind: input, shape index: {}]
  %s2 = inlined_call_operand.vmem [shape: f32[64,3], index: 2, kind: input, shape index: {}]
  %s3 = inlined_call_operand.vmem [shape: f32[1,128], index: 3, kind: output, shape index: {}]
  %s4 = sld [smem:[#allocation0]]
  $region22: #{_value_forward_impl.1} parent=0
    _
  %s6 = ssub.s32 1, %s4
  %s7 = scalar_select 0, %s6, %s4
  // Predicated region
  $region2: #{_value_forward_impl.1} parent=0 // pred_check
    _
  $region3: #{_value_forward_impl.1} parent=0 // pred_check_branch
    %9 = sbr.rel (0) target = $region5
  $region4: #{_value_forward_impl.1} parent=0 // pred_region
    _
  $region5: #{_value_forward_impl.1} parent=0 // pred_fallthru
    _
  // Predicated region
  $region6: #{_value_forward_impl.1} parent=0 // pred_check
    _
  $region7: #{_value_forward_impl.1} parent=0 // pred_check_branch
    %11 = sbr.rel (0) target = $region9
  $region8: #{_value_forward_impl.1} parent=0 // pred_region
    _
  $region9: #{_value_forward_impl.1} parent=0 // pred_fallthru
    _
  // Predicated region
  $region10: #{_value_forward_impl.1} parent=0 // pred_check
    _
  $region11: #{_value_forward_impl.1} parent=0 // pred_check_branch
    %13 = sbr.rel (0) target = $region13
  $region12: #{_value_forward_impl.1} parent=0 // pred_region
    _
  $region13: #{_value_forward_impl.1} parent=0 // pred_fallthru
    _
  %v14 = vld [vmem:[%s0] sm:$0xff]
  %v15 = vld [vmem:[%s0 + $0x8] sm:$0xff]
  %v16 = vld [vmem:[%s1] sm:$0xff]
  %v17 = vld [vmem:[%s1 + $0x8] sm:$0xff]
  %v18 = vld [vmem:[%s1 + $0x10] sm:$0xff]
  %v19 = vld [vmem:[%s1 + $0x18] sm:$0xff]
  %v20 = vld [vmem:[%s1 + $0x20] sm:$0xff]
  %v21 = vld [vmem:[%s1 + $0x28] sm:$0xff]
  %v22 = vld [vmem:[%s1 + $0x30] sm:$0xff]
  %v23 = vld [vmem:[%s1 + $0x38] sm:$0xff]
  %v24 = vld [vmem:[%s1 + $0x40] sm:$0xff]
  %v25 = vld [vmem:[%s1 + $0x48] sm:$0xff]
  %v26 = vld [vmem:[%s1 + $0x50] sm:$0xff]
  %v27 = vld [vmem:[%s1 + $0x58] sm:$0xff]
  %v28 = vld [vmem:[%s1 + $0x60] sm:$0xff]
  %v29 = vld [vmem:[%s1 + $0x68] sm:$0xff]
  %v30 = vld [vmem:[%s1 + $0x70] sm:$0xff]
  %v31 = vld [vmem:[%s1 + $0x78] sm:$0xff]
  %v32 = vld [vmem:[%s1 + $0x80] sm:$0x1]
  %v33 = vld [vmem:[%s2] sm:$0xff]
  %v34 = vld [vmem:[%s2 + $0x8] sm:$0xff]
  %v35 = vld [vmem:[%s2 + $0x10] sm:$0xff]
  %v36 = vld [vmem:[%s2 + $0x18] sm:$0xff]
  %v37 = vld [vmem:[%s2 + $0x20] sm:$0xff]
  %v38 = vld [vmem:[%s2 + $0x28] sm:$0xff]
  %v39 = vld [vmem:[%s2 + $0x30] sm:$0xff]
  %v40 = vld [vmem:[%s2 + $0x38] sm:$0xff]
  %v41 = vld [vmem:[%s2] sm:$0x1]
  %43 = vset.pattern.permute.xlu0 0
  %44 = vperm.xlu0 %43, %v33
  %v45 = vpop.permute.xlu0 %44
  %48 = vset.pattern.permute.xlu0 0
  %49 = vperm.xlu0 %48, %v34
  %v50 = vpop.permute.xlu0 %49
  %53 = vset.pattern.permute.xlu0 0
  %54 = vperm.xlu0 %53, %v35
  %v55 = vpop.permute.xlu0 %54
  %58 = vset.pattern.permute.xlu0 0
  %59 = vperm.xlu0 %58, %v36
  %v60 = vpop.permute.xlu0 %59
  %63 = vset.pattern.permute.xlu0 0
  %64 = vperm.xlu0 %63, %v37
  %v65 = vpop.permute.xlu0 %64
  %68 = vset.pattern.permute.xlu0 0
  %69 = vperm.xlu0 %68, %v38
  %v70 = vpop.permute.xlu0 %69
  %73 = vset.pattern.permute.xlu0 0
  %74 = vperm.xlu0 %73, %v39
  %v75 = vpop.permute.xlu0 %74
  %78 = vset.pattern.permute.xlu0 0
  %79 = vperm.xlu0 %78, %v40
  %v80 = vpop.permute.xlu0 %79
  %vm82 = vcmask 130048
  %v84 = vsel %vm82, %v16, 0
  %v87 = vsel %vm82, %v17, 0
  %v90 = vsel %vm82, %v18, 0
  %v93 = vsel %vm82, %v19, 0
  %v96 = vsel %vm82, %v20, 0
  %v99 = vsel %vm82, %v21, 0
  %v102 = vsel %vm82, %v22, 0
  %v105 = vsel %vm82, %v23, 0
  %107 = vmatprep.subr.mxu0 0.0
  %108 = vmatpush1.msra.mxu0 0.0
  %109 = vmatprep.subr.mxu0 0.0
  %110 = vmatpush1.msra.mxu0 0.0
  %111 = vmatprep.subr.mxu0 0.0
  %112 = vmatpush1.msra.mxu0 0.0
  %113 = vmatprep.subr.mxu0 0.0
  %114 = vmatpush1.msra.mxu0 0.0
  %115 = vmatprep.subr.mxu0 0.0
  %116 = vmatpush1.msra.mxu0 0.0
  %117 = vmatprep.subr.mxu0 0.0
  %118 = vmatpush1.msra.mxu0 0.0
  %119 = vmatprep.subr.mxu0 0.0
  %120 = vmatpush1.msra.mxu0 0.0
  %121 = vmatprep.subr.mxu0 0.0
  %122 = vmatpush1.msra.mxu0 0.0
  %123 = vmatprep.subr.mxu0 0.0
  %124 = vmatpush1.msra.mxu0 0.0
  %125 = vmatprep.subr.mxu0 0.0
  %126 = vmatpush1.msra.mxu0 0.0
  %127 = vmatprep.subr.mxu0 0.0
  %128 = vmatpush1.msra.mxu0 0.0
  %129 = vmatprep.subr.mxu0 0.0
  %130 = vmatpush1.msra.mxu0 0.0
  %131 = vmatprep.subr.mxu0 0.0
  %132 = vmatpush1.msra.mxu0 0.0
  %133 = vmatprep.subr.mxu0 0.0
  %134 = vmatpush1.msra.mxu0 0.0
  %135 = vmatprep.subr.mxu0 0.0
  %136 = vmatpush1.msra.mxu0 %v15
  %137 = vmatprep.subr.mxu0 0.0
  %138 = vmatpush1.msra.mxu0 %v14
  %139 = vmatprep.subr.mxu0 0.0
  %140 = vmatpush2.msra.mxu0 0.0
  %141 = vmatprep.subr.mxu0 0.0
  %142 = vmatpush2.msra.mxu0 0.0
  %143 = vmatprep.subr.mxu0 0.0
  %144 = vmatpush2.msra.mxu0 0.0
  %145 = vmatprep.subr.mxu0 0.0
  %146 = vmatpush2.msra.mxu0 0.0
  %147 = vmatprep.subr.mxu0 0.0
  %148 = vmatpush2.msra.mxu0 0.0
  %149 = vmatprep.subr.mxu0 0.0
  %150 = vmatpush2.msra.mxu0 0.0
  %151 = vmatprep.subr.mxu0 0.0
  %152 = vmatpush2.msra.mxu0 0.0
  %153 = vmatprep.subr.mxu0 0.0
  %154 = vmatpush2.msra.mxu0 0.0
  %155 = vmatprep.subr.mxu0 0.0
  %156 = vmatpush2.msra.mxu0 0.0
  %157 = vmatprep.subr.mxu0 0.0
  %158 = vmatpush2.msra.mxu0 0.0
  %159 = vmatprep.subr.mxu0 0.0
  %160 = vmatpush2.msra.mxu0 0.0
  %161 = vmatprep.subr.mxu0 0.0
  %162 = vmatpush2.msra.mxu0 0.0
  %163 = vmatprep.subr.mxu0 0.0
  %164 = vmatpush2.msra.mxu0 0.0
  %165 = vmatprep.subr.mxu0 0.0
  %166 = vmatpush2.msra.mxu0 0.0
  %167 = vmatprep.subr.mxu0 0.0
  %168 = vmatpush2.msra.mxu0 0.0
  %169 = vmatprep.subr.mxu0 0.0
  %170 = vmatpush2.msra.mxu0 0.0
  %171 = vmatprep.mubr.f32.mxu0 0.0
  %172 = vmatmul.mubr.f32.gmra.mxu0 %v84
  %v173 = vpop.f32.mrf.mxu0
  %v174 = vadd.f32 %v45, %v173
  %v175 = vpop.f32.mrf.mxu0
  %176 = vmatprep.mubr.f32.mxu0 0.0
  %177 = vmatmul.mubr.f32.gmra.mxu0 %v87
  %v178 = vpop.f32.mrf.mxu0
  %v179 = vadd.f32 %v50, %v178
  %v180 = vpop.f32.mrf.mxu0
  %181 = vmatprep.mubr.f32.mxu0 0.0
  %182 = vmatmul.mubr.f32.gmra.mxu0 %v90
  %v183 = vpop.f32.mrf.mxu0
  %v184 = vadd.f32 %v55, %v183
  %v185 = vpop.f32.mrf.mxu0
  %186 = vmatprep.mubr.f32.mxu0 0.0
  %187 = vmatmul.mubr.f32.gmra.mxu0 %v93
  %v188 = vpop.f32.mrf.mxu0
  %v189 = vadd.f32 %v60, %v188
  %v190 = vpop.f32.mrf.mxu0
  %191 = vmatprep.mubr.f32.mxu0 0.0
  %192 = vmatmul.mubr.f32.gmra.mxu0 %v96
  %v193 = vpop.f32.mrf.mxu0
  %v194 = vadd.f32 %v65, %v193
  %v195 = vpop.f32.mrf.mxu0
  %196 = vmatprep.mubr.f32.mxu0 0.0
  %197 = vmatmul.mubr.f32.gmra.mxu0 %v99
  %v198 = vpop.f32.mrf.mxu0
  %v199 = vadd.f32 %v70, %v198
  %v200 = vpop.f32.mrf.mxu0
  %201 = vmatprep.mubr.f32.mxu0 0.0
  %202 = vmatmul.mubr.f32.gmra.mxu0 %v102
  %v203 = vpop.f32.mrf.mxu0
  %v204 = vadd.f32 %v75, %v203
  %v205 = vpop.f32.mrf.mxu0
  %206 = vmatprep.mubr.f32.mxu0 0.0
  %207 = vmatmul.mubr.f32.gmra.mxu0 %v105
  %v208 = vpop.f32.mrf.mxu0
  %v209 = vadd.f32 %v80, %v208
  %v210 = vpop.f32.mrf.mxu0
  %211 = vdwg.mxu0
  %v212 = vtanh.pop %v174
  %v213 = vtanh.pop %v179
  %v214 = vtanh.pop %v184
  %v215 = vtanh.pop %v189
  %v216 = vtanh.pop %v194
  %v217 = vtanh.pop %v199
  %v218 = vtanh.pop %v204
  %v219 = vtanh.pop %v209
  %220 = vset.pattern.permute.xlu0 1
  %221 = vperm.xlu0 %220, %v33
  %v222 = vpop.permute.xlu0 %221
  %224 = vset.pattern.permute.xlu0 1
  %225 = vperm.xlu0 %224, %v34
  %v226 = vpop.permute.xlu0 %225
  %228 = vset.pattern.permute.xlu0 1
  %229 = vperm.xlu0 %228, %v35
  %v230 = vpop.permute.xlu0 %229
  %232 = vset.pattern.permute.xlu0 1
  %233 = vperm.xlu0 %232, %v36
  %v234 = vpop.permute.xlu0 %233
  %236 = vset.pattern.permute.xlu0 1
  %237 = vperm.xlu0 %236, %v37
  %v238 = vpop.permute.xlu0 %237
  %240 = vset.pattern.permute.xlu0 1
  %241 = vperm.xlu0 %240, %v38
  %v242 = vpop.permute.xlu0 %241
  %244 = vset.pattern.permute.xlu0 1
  %245 = vperm.xlu0 %244, %v39
  %v246 = vpop.permute.xlu0 %245
  %248 = vset.pattern.permute.xlu0 1
  %249 = vperm.xlu0 %248, %v40
  %v250 = vpop.permute.xlu0 %249
  %vm252 = vcmask 523264
  %v254 = vsel %vm252, %v24, 0
  %v257 = vsel %vm252, %v25, 0
  %v260 = vsel %vm252, %v26, 0
  %v263 = vsel %vm252, %v27, 0
  %v266 = vsel %vm252, %v28, 0
  %v269 = vsel %vm252, %v29, 0
  %v272 = vsel %vm252, %v30, 0
  %v275 = vsel %vm252, %v31, 0
  %277 = vmatprep.subr.mxu0 0.0
  %278 = vmatpush1.msra.mxu0 0.0
  %279 = vmatprep.subr.mxu0 0.0
  %280 = vmatpush1.msra.mxu0 0.0
  %281 = vmatprep.subr.mxu0 0.0
  %282 = vmatpush1.msra.mxu0 0.0
  %283 = vmatprep.subr.mxu0 0.0
  %284 = vmatpush1.msra.mxu0 0.0
  %285 = vmatprep.subr.mxu0 0.0
  %286 = vmatpush1.msra.mxu0 0.0
  %287 = vmatprep.subr.mxu0 0.0
  %288 = vmatpush1.msra.mxu0 0.0
  %289 = vmatprep.subr.mxu0 0.0
  %290 = vmatpush1.msra.mxu0 0.0
  %291 = vmatprep.subr.mxu0 0.0
  %292 = vmatpush1.msra.mxu0 0.0
  %293 = vmatprep.subr.mxu0 0.0
  %294 = vmatpush1.msra.mxu0 %v219
  %295 = vmatprep.subr.mxu0 0.0
  %296 = vmatpush1.msra.mxu0 %v218
  %297 = vmatprep.subr.mxu0 0.0
  %298 = vmatpush1.msra.mxu0 %v217
  %299 = vmatprep.subr.mxu0 0.0
  %300 = vmatpush1.msra.mxu0 %v216
  %301 = vmatprep.subr.mxu0 0.0
  %302 = vmatpush1.msra.mxu0 %v215
  %303 = vmatprep.subr.mxu0 0.0
  %304 = vmatpush1.msra.mxu0 %v214
  %305 = vmatprep.subr.mxu0 0.0
  %306 = vmatpush1.msra.mxu0 %v213
  %307 = vmatprep.subr.mxu0 0.0
  %308 = vmatpush1.msra.mxu0 %v212
  %309 = vmatprep.subr.mxu0 0.0
  %310 = vmatpush2.msra.mxu0 0.0
  %311 = vmatprep.subr.mxu0 0.0
  %312 = vmatpush2.msra.mxu0 0.0
  %313 = vmatprep.subr.mxu0 0.0
  %314 = vmatpush2.msra.mxu0 0.0
  %315 = vmatprep.subr.mxu0 0.0
  %316 = vmatpush2.msra.mxu0 0.0
  %317 = vmatprep.subr.mxu0 0.0
  %318 = vmatpush2.msra.mxu0 0.0
  %319 = vmatprep.subr.mxu0 0.0
  %320 = vmatpush2.msra.mxu0 0.0
  %321 = vmatprep.subr.mxu0 0.0
  %322 = vmatpush2.msra.mxu0 0.0
  %323 = vmatprep.subr.mxu0 0.0
  %324 = vmatpush2.msra.mxu0 0.0
  %325 = vmatprep.subr.mxu0 0.0
  %326 = vmatpush2.msra.mxu0 0.0
  %327 = vmatprep.subr.mxu0 0.0
  %328 = vmatpush2.msra.mxu0 0.0
  %329 = vmatprep.subr.mxu0 0.0
  %330 = vmatpush2.msra.mxu0 0.0
  %331 = vmatprep.subr.mxu0 0.0
  %332 = vmatpush2.msra.mxu0 0.0
  %333 = vmatprep.subr.mxu0 0.0
  %334 = vmatpush2.msra.mxu0 0.0
  %335 = vmatprep.subr.mxu0 0.0
  %336 = vmatpush2.msra.mxu0 0.0
  %337 = vmatprep.subr.mxu0 0.0
  %338 = vmatpush2.msra.mxu0 0.0
  %339 = vmatprep.subr.mxu0 0.0
  %340 = vmatpush2.msra.mxu0 0.0
  %341 = vmatprep.mubr.f32.mxu0 0.0
  %342 = vmatmul.mubr.f32.gmra.mxu0 %v254
  %v343 = vpop.f32.mrf.mxu0
  %v344 = vadd.f32 %v222, %v343
  %v345 = vpop.f32.mrf.mxu0
  %346 = vmatprep.mubr.f32.mxu0 0.0
  %347 = vmatmul.mubr.f32.gmra.mxu0 %v257
  %v348 = vpop.f32.mrf.mxu0
  %v349 = vadd.f32 %v226, %v348
  %v350 = vpop.f32.mrf.mxu0
  %351 = vmatprep.mubr.f32.mxu0 0.0
  %352 = vmatmul.mubr.f32.gmra.mxu0 %v260
  %v353 = vpop.f32.mrf.mxu0
  %v354 = vadd.f32 %v230, %v353
  %v355 = vpop.f32.mrf.mxu0
  %356 = vmatprep.mubr.f32.mxu0 0.0
  %357 = vmatmul.mubr.f32.gmra.mxu0 %v263
  %v358 = vpop.f32.mrf.mxu0
  %v359 = vadd.f32 %v234, %v358
  %v360 = vpop.f32.mrf.mxu0
  %361 = vmatprep.mubr.f32.mxu0 0.0
  %362 = vmatmul.mubr.f32.gmra.mxu0 %v266
  %v363 = vpop.f32.mrf.mxu0
  %v364 = vadd.f32 %v238, %v363
  %v365 = vpop.f32.mrf.mxu0
  %366 = vmatprep.mubr.f32.mxu0 0.0
  %367 = vmatmul.mubr.f32.gmra.mxu0 %v269
  %v368 = vpop.f32.mrf.mxu0
  %v369 = vadd.f32 %v242, %v368
  %v370 = vpop.f32.mrf.mxu0
  %371 = vmatprep.mubr.f32.mxu0 0.0
  %372 = vmatmul.mubr.f32.gmra.mxu0 %v272
  %v373 = vpop.f32.mrf.mxu0
  %v374 = vadd.f32 %v246, %v373
  %v375 = vpop.f32.mrf.mxu0
  %376 = vmatprep.mubr.f32.mxu0 0.0
  %377 = vmatmul.mubr.f32.gmra.mxu0 %v275
  %v378 = vpop.f32.mrf.mxu0
  %v379 = vadd.f32 %v250, %v378
  %v380 = vpop.f32.mrf.mxu0
  %381 = vdwg.mxu0
  %v382 = vtanh.pop %v344
  %v383 = vtanh.pop %v349
  %v384 = vtanh.pop %v354
  %v385 = vtanh.pop %v359
  %v386 = vtanh.pop %v364
  %v387 = vtanh.pop %v369
  %v388 = vtanh.pop %v374
  %v389 = vtanh.pop %v379
  %391 = vset.pattern.permute.xlu0 2
  %392 = vperm.xlu0 %391, %v41
  %v393 = vpop.permute.xlu0 %392
  %v396 = vsel %vm252, %v32, 0
  %398 = vmatprep.subr.mxu0 0.0
  %399 = vmatpush1.msra.mxu0 0.0
  %400 = vmatprep.subr.mxu0 0.0
  %401 = vmatpush1.msra.mxu0 0.0
  %402 = vmatprep.subr.mxu0 0.0
  %403 = vmatpush1.msra.mxu0 0.0
  %404 = vmatprep.subr.mxu0 0.0
  %405 = vmatpush1.msra.mxu0 0.0
  %406 = vmatprep.subr.mxu0 0.0
  %407 = vmatpush1.msra.mxu0 0.0
  %408 = vmatprep.subr.mxu0 0.0
  %409 = vmatpush1.msra.mxu0 0.0
  %410 = vmatprep.subr.mxu0 0.0
  %411 = vmatpush1.msra.mxu0 0.0
  %412 = vmatprep.subr.mxu0 0.0
  %413 = vmatpush1.msra.mxu0 0.0
  %414 = vmatprep.subr.mxu0 0.0
  %415 = vmatpush1.msra.mxu0 %v389
  %416 = vmatprep.subr.mxu0 0.0
  %417 = vmatpush1.msra.mxu0 %v388
  %418 = vmatprep.subr.mxu0 0.0
  %419 = vmatpush1.msra.mxu0 %v387
  %420 = vmatprep.subr.mxu0 0.0
  %421 = vmatpush1.msra.mxu0 %v386
  %422 = vmatprep.subr.mxu0 0.0
  %423 = vmatpush1.msra.mxu0 %v385
  %424 = vmatprep.subr.mxu0 0.0
  %425 = vmatpush1.msra.mxu0 %v384
  %426 = vmatprep.subr.mxu0 0.0
  %427 = vmatpush1.msra.mxu0 %v383
  %428 = vmatprep.subr.mxu0 0.0
  %429 = vmatpush1.msra.mxu0 %v382
  %430 = vmatprep.subr.mxu0 0.0
  %431 = vmatpush2.msra.mxu0 0.0
  %432 = vmatprep.subr.mxu0 0.0
  %433 = vmatpush2.msra.mxu0 0.0
  %434 = vmatprep.subr.mxu0 0.0
  %435 = vmatpush2.msra.mxu0 0.0
  %436 = vmatprep.subr.mxu0 0.0
  %437 = vmatpush2.msra.mxu0 0.0
  %438 = vmatprep.subr.mxu0 0.0
  %439 = vmatpush2.msra.mxu0 0.0
  %440 = vmatprep.subr.mxu0 0.0
  %441 = vmatpush2.msra.mxu0 0.0
  %442 = vmatprep.subr.mxu0 0.0
  %443 = vmatpush2.msra.mxu0 0.0
  %444 = vmatprep.subr.mxu0 0.0
  %445 = vmatpush2.msra.mxu0 0.0
  %446 = vmatprep.subr.mxu0 0.0
  %447 = vmatpush2.msra.mxu0 0.0
  %448 = vmatprep.subr.mxu0 0.0
  %449 = vmatpush2.msra.mxu0 0.0
  %450 = vmatprep.subr.mxu0 0.0
  %451 = vmatpush2.msra.mxu0 0.0
  %452 = vmatprep.subr.mxu0 0.0
  %453 = vmatpush2.msra.mxu0 0.0
  %454 = vmatprep.subr.mxu0 0.0
  %455 = vmatpush2.msra.mxu0 0.0
  %456 = vmatprep.subr.mxu0 0.0
  %457 = vmatpush2.msra.mxu0 0.0
  %458 = vmatprep.subr.mxu0 0.0
  %459 = vmatpush2.msra.mxu0 0.0
  %460 = vmatprep.subr.mxu0 0.0
  %461 = vmatpush2.msra.mxu0 0.0
  %462 = vmatprep.mubr.f32.mxu0 0.0
  %463 = vmatmul.mubr.f32.gmra.mxu0 %v396
  %v464 = vpop.f32.mrf.mxu0
  %v465 = vadd.f32 %v393, %v464
  %v466 = vpop.f32.mrf.mxu0
  %467 = vdwg.mxu0
  %468 = vst [vmem:[%s3] sm:$0x1] %v465
  // Predicated region
  $region14: #{_value_forward_impl.1} parent=0 // pred_check
    _
  $region15: #{_value_forward_impl.1} parent=0 // pred_check_branch
    %470 = sbr.rel (0) target = $region17
  $region16: #{_value_forward_impl.1} parent=0 // pred_region
    _
  $region17: #{_value_forward_impl.1} parent=0 // pred_fallthru
    _
  // Predicated region
  $region18: #{_value_forward_impl.1} parent=0 // pred_check
    _
  $region19: #{_value_forward_impl.1} parent=0 // pred_check_branch
    %472 = sbr.rel (0) target = $region21
  $region20: #{_value_forward_impl.1} parent=0 // pred_region
    _
  $region21: #{_value_forward_impl.1} parent=0 // pred_fallthru
    _

</llo_original>
